<compile_context>
chip_gen: v5e
topology: v5e:2x2
jax: 0.10.0
libtpu: 0.0.40
codegen_flags: <defaults>
</compile_context>

<pallas_src>
import functools

import jax
import jax.numpy as jnp
import numpy as np
from jax import lax
from jax.experimental import pallas as pl
from jax.experimental.pallas import tpu as pltpu

LEAKY_SLOPE = 0.01              # nn.LeakyReLU() default
BN_EPS = 1e-5                   # nn.BatchNorm2d default
VMEM_LIMIT = 32 * 1024 * 1024   # explicit scoped-VMEM budget (fits v5e/v6e/v7x)
TM_TARGET = 512                 # M-tile target (rows of im2col matrix)
TK_TARGET = 2048                # K-tile target (contraction dim)


# ------------------------------ tiling helpers ------------------------------

def _round_up(x, m):
    return -(-x // m) * m


def _pick_m_tile(m):
    """M tile: multiple of 8, capped at TM_TARGET; returns (tm, m_padded)."""
    tm = min(TM_TARGET, _round_up(m, 8))
    return tm, _round_up(m, tm)


def _pick_k_tile(k_pad):
    """Largest multiple of 128 that divides k_pad and is <= TK_TARGET."""
    if k_pad <= TK_TARGET:
        return k_pad
    best = 128
    for t in range(256, TK_TARGET + 1, 128):
        if k_pad % t == 0:
            best = t
    return best


# ------------------------------- Pallas kernels ------------------------------

def matmul_bias_act_kernel(x_ref, w_ref, b_ref, o_ref, *, apply_leaky):
    """im2col conv matmul.  Grid = (M tiles, K tiles); o_ref (f32) is resident
    across the K axis and is the accumulator.  Bias (+ optional LeakyReLU) is
    fused into the final K step."""
    k = pl.program_id(1)

    @pl.when(k == 0)
    def _():
        o_ref[...] = jnp.zeros_like(o_ref)

    o_ref[...] += jnp.dot(x_ref[...], w_ref[...],
                          preferred_element_type=jnp.float32)

    @pl.when(k == pl.num_programs(1) - 1)
    def _():
        y = o_ref[...] + b_ref[...]
        if apply_leaky:
            y = jnp.where(y > 0, y, LEAKY_SLOPE * y)
        o_ref[...] = y


def bn_stats_kernel(x_ref, sum_ref, sq_ref):
    """Accumulate per-channel sum and sum-of-squares over M tiles (reduction)."""
    @pl.when(pl.program_id(0) == 0)
    def _():
        sum_ref[...] = jnp.zeros_like(sum_ref)
        sq_ref[...] = jnp.zeros_like(sq_ref)

    x = x_ref[...]
    sum_ref[...] += jnp.sum(x, axis=0, keepdims=True)
    sq_ref[...] += jnp.sum(x * x, axis=0, keepdims=True)


def affine_leaky_kernel(x_ref, scale_ref, shift_ref, o_ref):
    """Folded BatchNorm affine (per-channel scale/shift) + LeakyReLU, per M tile."""
    y = x_ref[...] * scale_ref[...] + shift_ref[...]
    o_ref[...] = jnp.where(y > 0, y, LEAKY_SLOPE * y)


# --------------------------------- wrappers ----------------------------------

def _im2col(x_nhwc, k, stride, pad):
    """[N,H,W,C] -> patches [N*Ho*Wo, k*k*C] with (kh, kw, cin) minor ordering."""
    N, H, W, C = x_nhwc.shape
    xp = jnp.pad(x_nhwc, ((0, 0), (pad, pad), (pad, pad), (0, 0)))
    Ho = (H + 2 * pad - k) // stride + 1
    Wo = (W + 2 * pad - k) // stride + 1
    cols = []
    for di in range(k):
        for dj in range(k):
            sl = xp[:, di:di + (Ho - 1) * stride + 1:stride,
                       dj:dj + (Wo - 1) * stride + 1:stride, :]
            cols.append(sl)                              # [N, Ho, Wo, C]
    p = jnp.stack(cols, axis=3)                          # [N, Ho, Wo, k*k, C]
    return p.reshape(N * Ho * Wo, k * k * C), (N, Ho, Wo)


def conv2d_pallas(x_nhwc, w_oihw, b, stride, pad, *, apply_leaky=False):
    """Conv2d (PyTorch OIHW weights) via tiled Pallas im2col matmul.

    Returns the valid [M, Cout] slab (M = N*Ho*Wo) in f32.
    """
    Cout, Cin, kh, kw = w_oihw.shape

    # bf16 activations before im2col: halves the expanded-patch HBM traffic.
    patches, (N, Ho, Wo) = _im2col(x_nhwc.astype(jnp.bfloat16), kh, stride, pad)
    M, K = patches.shape

    K_pad = _round_up(K, 128)               # lane-aligned contraction dim
    C_pad = _round_up(Cout, 128)            # lane-dense output (fixes Cout=1)
    tm, M_pad = _pick_m_tile(M)
    tk = _pick_k_tile(K_pad)

    if M_pad != M or K_pad != K:
        patches = jnp.pad(patches, ((0, M_pad - M), (0, K_pad - K)))

    w_mat = jnp.transpose(w_oihw, (2, 3, 1, 0)).reshape(kh * kw * Cin, Cout)
    if K_pad != K or C_pad != Cout:
        w_mat = jnp.pad(w_mat, ((0, K_pad - K), (0, C_pad - Cout)))
    w_mat = w_mat.astype(jnp.bfloat16)
    b_pad = jnp.pad(b.astype(jnp.float32), (0, C_pad - Cout)).reshape(1, C_pad)

    kernel = functools.partial(matmul_bias_act_kernel, apply_leaky=apply_leaky)
    y = pl.pallas_call(
        kernel,
        out_shape=jax.ShapeDtypeStruct((M_pad, C_pad), jnp.float32),
        grid_spec=pltpu.PrefetchScalarGridSpec(
            num_scalar_prefetch=0,
            grid=(M_pad // tm, K_pad // tk),
            in_specs=[pl.BlockSpec((tm, tk), lambda i, k: (i, k)),
                      pl.BlockSpec((tk, C_pad), lambda i, k: (k, 0)),
                      pl.BlockSpec((1, C_pad), lambda i, k: (0, 0))],
            out_specs=pl.BlockSpec((tm, C_pad), lambda i, k: (i, 0))),
        compiler_params=pltpu.CompilerParams(
            dimension_semantics=("parallel", "arbitrary"),
            vmem_limit_bytes=VMEM_LIMIT),
    )(patches, w_mat, b_pad)

    return y[:M, :Cout], (N, Ho, Wo)


def bn_leaky_pallas(y2d, gamma, beta):
    """Training-mode BatchNorm2d (global batch stats over all M rows) fused with
    LeakyReLU, tiled over M in two Pallas passes."""
    M, C = y2d.shape
    tm, M_pad = _pick_m_tile(M)
    y_pad = jnp.pad(y2d, ((0, M_pad - M), (0, 0))) if M_pad != M else y2d

    # Pass 1: per-channel sum / sum-of-squares (zero-padded rows contribute 0).
    s, sq = pl.pallas_call(
        bn_stats_kernel,
        out_shape=(jax.ShapeDtypeStruct((1, C), jnp.float32),
                   jax.ShapeDtypeStruct((1, C), jnp.float32)),
        grid_spec=pltpu.PrefetchScalarGridSpec(
            num_scalar_prefetch=0,
            grid=(M_pad // tm,),
            in_specs=[pl.BlockSpec((tm, C), lambda i: (i, 0))],
            out_specs=(pl.BlockSpec((1, C), lambda i: (0, 0)),
                       pl.BlockSpec((1, C), lambda i: (0, 0)))),
        compiler_params=pltpu.CompilerParams(
            dimension_semantics=("arbitrary",),
            vmem_limit_bytes=VMEM_LIMIT),
    )(y_pad)

    mean = s[0] / M
    var = jnp.maximum(sq[0] / M - mean * mean, 0.0)       # biased variance
    scale = gamma * lax.rsqrt(var + BN_EPS)
    shift = beta - mean * scale

    # Pass 2: folded per-channel affine + LeakyReLU, tiled over M.
    out = pl.pallas_call(
        affine_leaky_kernel,
        out_shape=jax.ShapeDtypeStruct((M_pad, C), jnp.float32),
        grid_spec=pltpu.PrefetchScalarGridSpec(
            num_scalar_prefetch=0,
            grid=(M_pad // tm,),
            in_specs=[pl.BlockSpec((tm, C), lambda i: (i, 0)),
                      pl.BlockSpec((1, C), lambda i: (0, 0)),
                      pl.BlockSpec((1, C), lambda i: (0, 0))],
            out_specs=pl.BlockSpec((tm, C), lambda i: (i, 0))),
        compiler_params=pltpu.CompilerParams(
            dimension_semantics=("parallel",),
            vmem_limit_bytes=VMEM_LIMIT),
    )(y_pad, scale.reshape(1, C), shift.reshape(1, C))
    return out[:M]


def pix2pix_discriminator_forward(x_nchw, params):
    x = jnp.transpose(x_nchw, (0, 2, 3, 1)).astype(jnp.float32)   # NCHW -> NHWC

    # EncoderBlock 1: Conv(k4,s2,p1) + LeakyReLU  (no BatchNorm); leaky fused
    # into the matmul epilogue.
    y, (N, Ho, Wo) = conv2d_pallas(x, params["w1"], params["b1"], 2, 1,
                                   apply_leaky=True)
    x = y.reshape(N, Ho, Wo, -1)

    # EncoderBlocks 2, 3: Conv(k4,s2,p1) + BatchNorm + LeakyReLU
    for i in (2, 3):
        y, (N, Ho, Wo) = conv2d_pallas(x, params[f"w{i}"], params[f"b{i}"], 2, 1)
        y = bn_leaky_pallas(y, params[f"g{i}"], params[f"be{i}"])
        x = y.reshape(N, Ho, Wo, -1)

    # Conv(k4,s1,p1) + BatchNorm + LeakyReLU
    y, (N, Ho, Wo) = conv2d_pallas(x, params["w4"], params["b4"], 1, 1)
    y = bn_leaky_pallas(y, params["g4"], params["be4"])
    x = y.reshape(N, Ho, Wo, -1)

    # Final Conv(k4,s1,p1) -> 1 channel, no activation (Cout padded to 128 in
    # the kernel for a lane-dense store, sliced back to 1 here).
    y, (N, Ho, Wo) = conv2d_pallas(x, params["w5"], params["b5"], 1, 1)
    out = y.reshape(N, Ho, Wo, 1)
    return jnp.transpose(out, (0, 3, 1, 2))                       # back to NCHW


# ----------------------------- pure-JAX reference -----------------------------
# Same precision policy as the kernels (bf16 matmul operands, f32 accumulation)
# so the comparison verifies the Pallas implementation, not bf16 rounding.

def _ref_forward(x_nchw, params):
    def conv(x, w, b, s, p):
        patches, (N, Ho, Wo) = _im2col(x.astype(jnp.bfloat16), w.shape[2], s, p)
        wm = jnp.transpose(w, (2, 3, 1, 0)).reshape(-1, w.shape[0])
        y = jnp.dot(patches, wm.astype(jnp.bfloat16),
                    preferred_element_type=jnp.float32) + b[None, :]
        return y, (N, Ho, Wo)

    def bn_leaky(y, g, be):
        mean = y.mean(0, keepdims=True)
        var = ((y - mean) ** 2).mean(0, keepdims=True)
        y = (y - mean) / jnp.sqrt(var + BN_EPS) * g[None, :] + be[None, :]
        return jnp.where(y > 0, y, LEAKY_SLOPE * y)

    x = jnp.transpose(x_nchw, (0, 2, 3, 1)).astype(jnp.float32)
    y, (N, Ho, Wo) = conv(x, params["w1"], params["b1"], 2, 1)
    y = jnp.where(y > 0, y, LEAKY_SLOPE * y)
    x = y.reshape(N, Ho, Wo, -1)
    for i in (2, 3):
        y, (N, Ho, Wo) = conv(x, params[f"w{i}"], params[f"b{i}"], 2, 1)
        y = bn_leaky(y, params[f"g{i}"], params[f"be{i}"])
        x = y.reshape(N, Ho, Wo, -1)
    y, (N, Ho, Wo) = conv(x, params["w4"], params["b4"], 1, 1)
    y = bn_leaky(y, params["g4"], params["be4"])
    x = y.reshape(N, Ho, Wo, -1)
    y, (N, Ho, Wo) = conv(x, params["w5"], params["b5"], 1, 1)
    return jnp.transpose(y.reshape(N, Ho, Wo, 1), (0, 3, 1, 2))


# ----------------------------------- params -----------------------------------

def init_params(key, in_channels=3, out_channels=3, features=64):
    cin = in_channels + out_channels
    dims = [(features, cin), (2 * features, features), (4 * features, 2 * features),
            (8 * features, 4 * features), (1, 8 * features)]
    params = {}
    keys = jax.random.split(key, 4 * len(dims))
    ki = 0
    for idx, (co, ci) in enumerate(dims, start=1):
        fan_in = ci * 4 * 4
        params[f"w{idx}"] = (jax.random.normal(keys[ki], (co, ci, 4, 4), jnp.float32)
                             / np.sqrt(fan_in)); ki += 1
        params[f"b{idx}"] = 0.1 * jax.random.normal(keys[ki], (co,), jnp.float32); ki += 1
        if idx in (2, 3, 4):   # layers with BatchNorm2d
            params[f"g{idx}"] = 1.0 + 0.1 * jax.random.normal(keys[ki], (co,), jnp.float32); ki += 1
            params[f"be{idx}"] = 0.1 * jax.random.normal(keys[ki], (co,), jnp.float32); ki += 1
    return params


if __name__ == "__main__":
    key = jax.random.PRNGKey(0)
    pkey, xkey = jax.random.split(key)
    params = init_params(pkey)

    # Discriminator input = concat(condition image, generated image) -> 3+3 = 6 channels.
    x = jax.random.normal(xkey, (2, 6, 32, 32), jnp.float32)

    out = jax.block_until_ready(pix2pix_discriminator_forward(x, params))
    ref = jax.block_until_ready(_ref_forward(x, params))

    assert out.shape == (2, 1, 2, 2), out.shape
    np.testing.assert_allclose(np.asarray(out), np.asarray(ref), rtol=2e-2, atol=2e-2)
    print("KERNEL_OK")
</pallas_src>

<mosaic_0001>
module attributes {stable_mosaic.version = 11 : i64} {
  func.func @matmul_bias_act_kernel(%arg0: i32, %arg1: i32, %arg2: memref<512x128xbf16, #tpu.memory_space<vmem>>, %arg3: memref<128x128xbf16, #tpu.memory_space<vmem>>, %arg4: memref<1x128xf32, #tpu.memory_space<vmem>>, %arg5: memref<512x128xf32, #tpu.memory_space<vmem>>) attributes {dimension_semantics = [#tpu.dimension_semantics<parallel>, #tpu.dimension_semantics<arbitrary>], iteration_bounds = array<i64: 1, 1>, scalar_prefetch = 0 : i64, scratch_operands = 0 : i64, tpu.core_type = #tpu.core_type<tc>, window_params = [{transform_indices = @transform_0, window_bounds = array<i64: 512, 128>}, {transform_indices = @transform_1, window_bounds = array<i64: 128, 128>}, {pipeline_mode = #tpu.pipeline_mode<synchronous>, transform_indices = @transform_2, window_bounds = array<i64: 1, 128>}, {transform_indices = @transform_3, window_bounds = array<i64: 512, 128>}]} {
    %c0_i32 = arith.constant 0 : i32
    %0 = arith.cmpi eq, %arg1, %c0_i32 : i32
    %1 = arith.extui %0 : i1 to i32
    %c0_i32_0 = arith.constant 0 : i32
    %2 = arith.cmpi ne, %1, %c0_i32_0 : i32
    scf.if %2 {
      %cst_10 = arith.constant 0.000000e+00 : f32
      %12 = vector.broadcast %cst_10 : f32 to vector<512x128xf32>
      %c0_11 = arith.constant 0 : index
      %c0_12 = arith.constant 0 : index
      %13 = vector.load %arg5[%c0_11, %c0_12] : memref<512x128xf32, #tpu.memory_space<vmem>>, vector<512x128xf32>
      tpu.vector_store %arg5[%c0_11, %c0_12], %12 {strides = array<i32>} : memref<512x128xf32, #tpu.memory_space<vmem>>, vector<512x128xf32>,
    } else {
    }
    %c0 = arith.constant 0 : index
    %c0_1 = arith.constant 0 : index
    %3 = vector.load %arg5[%c0, %c0_1] : memref<512x128xf32, #tpu.memory_space<vmem>>, vector<512x128xf32>
    %c0_2 = arith.constant 0 : index
    %c0_3 = arith.constant 0 : index
    %4 = vector.load %arg2[%c0_2, %c0_3] : memref<512x128xbf16, #tpu.memory_space<vmem>>, vector<512x128xbf16>
    %c0_4 = arith.constant 0 : index
    %c0_5 = arith.constant 0 : index
    %5 = vector.load %arg3[%c0_4, %c0_5] : memref<128x128xbf16, #tpu.memory_space<vmem>>, vector<128x128xbf16>
    %cst = arith.constant dense<0.000000e+00> : vector<512x128xf32>
    %6 = tpu.matmul %4, %5, %cst {dimension_numbers = #tpu.dot_dimension_numbers<[1], [0], [0], [1], [0, 0, 1, 1], [], []>} : vector<512x128xbf16>, vector<128x128xbf16>, vector<512x128xf32> -> vector<512x128xf32>
    %7 = arith.addf %3, %6 : vector<512x128xf32>
    %c0_6 = arith.constant 0 : index
    %c0_7 = arith.constant 0 : index
    %8 = vector.load %arg5[%c0_6, %c0_7] : memref<512x128xf32, #tpu.memory_space<vmem>>, vector<512x128xf32>
    tpu.vector_store %arg5[%c0_6, %c0_7], %7 {strides = array<i32>} : memref<512x128xf32, #tpu.memory_space<vmem>>, vector<512x128xf32>,
    %c0_i32_8 = arith.constant 0 : i32
    %9 = arith.cmpi eq, %arg1, %c0_i32_8 : i32
    %10 = arith.extui %9 : i1 to i32
    %c0_i32_9 = arith.constant 0 : i32
    %11 = arith.cmpi ne, %10, %c0_i32_9 : i32
    scf.if %11 {
      %c0_10 = arith.constant 0 : index
      %c0_11 = arith.constant 0 : index
      %12 = vector.load %arg5[%c0_10, %c0_11] : memref<512x128xf32, #tpu.memory_space<vmem>>, vector<512x128xf32>
      %c0_12 = arith.constant 0 : index
      %c0_13 = arith.constant 0 : index
      %13 = vector.load %arg4[%c0_12, %c0_13] : memref<1x128xf32, #tpu.memory_space<vmem>>, vector<1x128xf32>
      %14 = vector.broadcast %13 : vector<1x128xf32> to vector<512x128xf32>
      %15 = arith.addf %12, %14 : vector<512x128xf32>
      %cst_14 = arith.constant 0.000000e+00 : f32
      %16 = vector.broadcast %cst_14 : f32 to vector<512x128xf32>
      %17 = arith.cmpf ogt, %15, %16 : vector<512x128xf32>
      %cst_15 = arith.constant 0.00999999977 : f32
      %18 = vector.broadcast %cst_15 : f32 to vector<512x128xf32>
      %19 = arith.mulf %18, %15 : vector<512x128xf32>
      %20 = arith.select %17, %15, %19 : vector<512x128xi1>, vector<512x128xf32>
      %c0_16 = arith.constant 0 : index
      %c0_17 = arith.constant 0 : index
      %21 = vector.load %arg5[%c0_16, %c0_17] : memref<512x128xf32, #tpu.memory_space<vmem>>, vector<512x128xf32>
      tpu.vector_store %arg5[%c0_16, %c0_17], %20 {strides = array<i32>} : memref<512x128xf32, #tpu.memory_space<vmem>>, vector<512x128xf32>,
    } else {
    }
    return
  }
  func.func @transform_0(%arg0: i32, %arg1: i32) -> (i32, i32) {
    %c0_i32 = arith.constant 0 : i32
    return %arg0, %arg1 : i32, i32
  }
  func.func @transform_1(%arg0: i32, %arg1: i32) -> (i32, i32) {
    %c0_i32 = arith.constant 0 : i32
    %c0_i32_0 = arith.constant 0 : i32
    return %arg1, %c0_i32 : i32, i32
  }
  func.func @transform_2(%arg0: i32, %arg1: i32) -> (i32, i32) {
    %c0_i32 = arith.constant 0 : i32
    %c0_i32_0 = arith.constant 0 : i32
    %c0_i32_1 = arith.constant 0 : i32
    return %c0_i32, %c0_i32_0 : i32, i32
  }
  func.func @transform_3(%arg0: i32, %arg1: i32) -> (i32, i32) {
    %c0_i32 = arith.constant 0 : i32
    %c0_i32_0 = arith.constant 0 : i32
    return %arg0, %c0_i32 : i32, i32
  }
}

</mosaic_0001>

<llo_original>
// kernel: tpu_custom_call.1
$region0: #{tpu_custom_call.1}
  #allocation0 [shape = 'u32[]', space=smem, size = 0x4, offset = 0x4, fixed_abs, tag = 'smem constant byte address 0x4 - core index']
  #allocation1 [shape = 'u32[72,128]{1,0:T(1,128)}', space=vmem, size = 0x9000, scoped, tag = 'internal scratch']
  %s0 = inlined_call_operand.hbm [shape: bf16[512,128], index: 0, kind: input, shape index: {}]
  %s1 = inlined_call_operand.hbm [shape: bf16[128,128], index: 1, kind: input, shape index: {}]
  %s2 = inlined_call_operand.vmem [shape: f32[1,128], index: 2, kind: input, shape index: {}]
  %s3 = inlined_call_operand.hbm [shape: f32[512,128], index: 3, kind: output, shape index: {}]
  %s4 = sld [smem:[#allocation0]]
  $region38: #{tpu_custom_call.1} parent=0
    _
  %s6 = ssub.s32 1, %s4
  %s7 = scalar_select 0, %s6, %s4
  $region1: #{tpu_custom_call.1} parent=0
    #allocation2 [shape = 'u8[131072]{0}', space=vmem, size = 0x20000, scoped, tag = 'input window, operand 0, single buffered']
    #allocation3 [shape = 's32[1]{0}', space=sflag, size = 0x4, scoped, tag = 'scoped memory for tpu_custom_call.1']
    #allocation4 [shape = 's32[1]{0}', space=sflag, size = 0x4, scoped, tag = 'scoped memory for tpu_custom_call.1']
    #allocation5 [shape = 'u8[32768]{0}', space=vmem, size = 0x8000, scoped, tag = 'input window, operand 1, single buffered']
    #allocation6 [shape = 's32[1]{0}', space=sflag, size = 0x4, scoped, tag = 'scoped memory for tpu_custom_call.1']
    #allocation7 [shape = 'u8[262144]{0}', space=vmem, size = 0x40000, scoped, tag = 'output window, operand 0, single buffered']
    %8 = vsyncpa [#allocation3], 0
    %9 = vsyncpa [#allocation6], 0
    %10 = vsyncpa [#allocation4], 0
    // Predicated region
    $region2: #{tpu_custom_call.1} parent=1 // pred_check
      _
    $region3: #{tpu_custom_call.1} parent=1 // pred_check_branch
      %12 = sbr.rel (0) target = $region5
    $region4: #{tpu_custom_call.1} parent=1 // pred_region
      %14 = vsyncadd [#allocation3], 0
      %s15 = sshll.u32 %s0, 4
      %s16 = int_to_ptr.hbm [resolvable:$true] %s15
      %s17 = sshll.u32 [#allocation2], 4
      %s18 = int_to_ptr.vmem [resolvable:$true] %s17
      %23 = dma.hbm_to_vmem [thread:$0]  %s16, 4096, %s18, [#allocation3], 64, 64, 4
    $region5: #{tpu_custom_call.1} parent=1 // pred_fallthru
      _
    // Predicated region
    $region6: #{tpu_custom_call.1} parent=1 // pred_check
      _
    $region7: #{tpu_custom_call.1} parent=1 // pred_check_branch
      %25 = sbr.rel (0) target = $region9
    $region8: #{tpu_custom_call.1} parent=1 // pred_region
      %27 = vsyncadd [#allocation6], 0
      %s28 = sshll.u32 %s1, 4
      %s29 = int_to_ptr.hbm [resolvable:$true] %s28
      %s30 = sshll.u32 [#allocation5], 4
      %s31 = int_to_ptr.vmem [resolvable:$true] %s30
      %36 = dma.hbm_to_vmem [thread:$0]  %s29, 1024, %s31, [#allocation6], 64, 64, 4
    $region9: #{tpu_custom_call.1} parent=1 // pred_fallthru
      _
    // Predicated region
    $region10: #{tpu_custom_call.1} parent=1 // pred_check
      _
    $region11: #{tpu_custom_call.1} parent=1 // pred_check_branch
      %38 = sbr.rel (0) target = $region13
    $region12: #{tpu_custom_call.1} parent=1 // pred_region
      _
    $region13: #{tpu_custom_call.1} parent=1 // pred_fallthru
      _
    // Predicated region
    $region14: #{tpu_custom_call.1} parent=1 // pred_check
      _
    $region15: #{tpu_custom_call.1} parent=1 // pred_check_branch
      %40 = sbr.rel (0) target = $region17
    $region16: #{tpu_custom_call.1} parent=1 // pred_region
      %42 = dma.done [#allocation3], 4096
    $region17: #{tpu_custom_call.1} parent=1 // pred_fallthru
      _
    // Predicated region
    $region18: #{tpu_custom_call.1} parent=1 // pred_check
      _
    $region19: #{tpu_custom_call.1} parent=1 // pred_check_branch
      %44 = sbr.rel (0) target = $region21
    $region20: #{tpu_custom_call.1} parent=1 // pred_region
      %46 = dma.done [#allocation6], 1024
    $region21: #{tpu_custom_call.1} parent=1 // pred_fallthru
      _
    %p47 = scmp.eq.s32.totalorder 0, 0
    // Predicated region
    $region22: #{tpu_custom_call.1} parent=1 // pred_check
      %p48 = pneg %p47
    $region23: #{tpu_custom_call.1} parent=1 // pred_check_branch
      %50 = sbr.rel (%p48) target = $region25
    $region24: #{tpu_custom_call.1} parent=1 // pred_region
      %51 = vst [vmem:[#allocation7] sm:$0xff] 0.0
      %52 = vst [vmem:[#allocation7 + $0x8] sm:$0xff] 0.0
      %53 = vst [vmem:[#allocation7 + $0x10] sm:$0xff] 0.0
      %54 = vst [vmem:[#allocation7 + $0x18] sm:$0xff] 0.0
      %55 = vst [vmem:[#allocation7 + $0x20] sm:$0xff] 0.0
      %56 = vst [vmem:[#allocation7 + $0x28] sm:$0xff] 0.0
      %57 = vst [vmem:[#allocation7 + $0x30] sm:$0xff] 0.0
      %58 = vst [vmem:[#allocation7 + $0x38] sm:$0xff] 0.0
      %59 = vst [vmem:[#allocation7 + $0x40] sm:$0xff] 0.0
      %60 = vst [vmem:[#allocation7 + $0x48] sm:$0xff] 0.0
      %61 = vst [vmem:[#allocation7 + $0x50] sm:$0xff] 0.0
      %62 = vst [vmem:[#allocation7 + $0x58] sm:$0xff] 0.0
      %63 = vst [vmem:[#allocation7 + $0x60] sm:$0xff] 0.0
      %64 = vst [vmem:[#allocation7 + $0x68] sm:$0xff] 0.0
      %65 = vst [vmem:[#allocation7 + $0x70] sm:$0xff] 0.0
      %66 = vst [vmem:[#allocation7 + $0x78] sm:$0xff] 0.0
      %67 = vst [vmem:[#allocation7 + $0x80] sm:$0xff] 0.0
      %68 = vst [vmem:[#allocation7 + $0x88] sm:$0xff] 0.0
      %69 = vst [vmem:[#allocation7 + $0x90] sm:$0xff] 0.0
      %70 = vst [vmem:[#allocation7 + $0x98] sm:$0xff] 0.0
      %71 = vst [vmem:[#allocation7 + $0xa0] sm:$0xff] 0.0
      %72 = vst [vmem:[#allocation7 + $0xa8] sm:$0xff] 0.0
      %73 = vst [vmem:[#allocation7 + $0xb0] sm:$0xff] 0.0
      %74 = vst [vmem:[#allocation7 + $0xb8] sm:$0xff] 0.0
      %75 = vst [vmem:[#allocation7 + $0xc0] sm:$0xff] 0.0
      %76 = vst [vmem:[#allocation7 + $0xc8] sm:$0xff] 0.0
      %77 = vst [vmem:[#allocation7 + $0xd0] sm:$0xff] 0.0
      %78 = vst [vmem:[#allocation7 + $0xd8] sm:$0xff] 0.0
      %79 = vst [vmem:[#allocation7 + $0xe0] sm:$0xff] 0.0
      %80 = vst [vmem:[#allocation7 + $0xe8] sm:$0xff] 0.0
      %81 = vst [vmem:[#allocation7 + $0xf0] sm:$0xff] 0.0
      %82 = vst [vmem:[#allocation7 + $0xf8] sm:$0xff] 0.0
      %83 = vst [vmem:[#allocation7 + $0x100] sm:$0xff] 0.0
      %84 = vst [vmem:[#allocation7 + $0x108] sm:$0xff] 0.0
      %85 = vst [vmem:[#allocation7 + $0x110] sm:$0xff] 0.0
      %86 = vst [vmem:[#allocation7 + $0x118] sm:$0xff] 0.0
      %87 = vst [vmem:[#allocation7 + $0x120] sm:$0xff] 0.0
      %88 = vst [vmem:[#allocation7 + $0x128] sm:$0xff] 0.0
      %89 = vst [vmem:[#allocation7 + $0x130] sm:$0xff] 0.0
      %90 = vst [vmem:[#allocation7 + $0x138] sm:$0xff] 0.0
      %91 = vst [vmem:[#allocation7 + $0x140] sm:$0xff] 0.0
      %92 = vst [vmem:[#allocation7 + $0x148] sm:$0xff] 0.0
      %93 = vst [vmem:[#allocation7 + $0x150] sm:$0xff] 0.0
      %94 = vst [vmem:[#allocation7 + $0x158] sm:$0xff] 0.0
      %95 = vst [vmem:[#allocation7 + $0x160] sm:$0xff] 0.0
      %96 = vst [vmem:[#allocation7 + $0x168] sm:$0xff] 0.0
      %97 = vst [vmem:[#allocation7 + $0x170] sm:$0xff] 0.0
      %98 = vst [vmem:[#allocation7 + $0x178] sm:$0xff] 0.0
      %99 = vst [vmem:[#allocation7 + $0x180] sm:$0xff] 0.0
      %100 = vst [vmem:[#allocation7 + $0x188] sm:$0xff] 0.0
      %101 = vst [vmem:[#allocation7 + $0x190] sm:$0xff] 0.0
      %102 = vst [vmem:[#allocation7 + $0x198] sm:$0xff] 0.0
      %103 = vst [vmem:[#allocation7 + $0x1a0] sm:$0xff] 0.0
      %104 = vst [vmem:[#allocation7 + $0x1a8] sm:$0xff] 0.0
      %105 = vst [vmem:[#allocation7 + $0x1b0] sm:$0xff] 0.0
      %106 = vst [vmem:[#allocation7 + $0x1b8] sm:$0xff] 0.0
      %107 = vst [vmem:[#allocation7 + $0x1c0] sm:$0xff] 0.0
      %108 = vst [vmem:[#allocation7 + $0x1c8] sm:$0xff] 0.0
      %109 = vst [vmem:[#allocation7 + $0x1d0] sm:$0xff] 0.0
      %110 = vst [vmem:[#allocation7 + $0x1d8] sm:$0xff] 0.0
      %111 = vst [vmem:[#allocation7 + $0x1e0] sm:$0xff] 0.0
      %112 = vst [vmem:[#allocation7 + $0x1e8] sm:$0xff] 0.0
      %113 = vst [vmem:[#allocation7 + $0x1f0] sm:$0xff] 0.0
      %114 = vst [vmem:[#allocation7 + $0x1f8] sm:$0xff] 0.0
    $region25: #{tpu_custom_call.1} parent=1 // pred_fallthru
      _
    %v115 = vld [vmem:[#allocation7] sm:$0xff]
    %v116 = vld [vmem:[#allocation7 + $0x8] sm:$0xff]
    %v117 = vld [vmem:[#allocation7 + $0x10] sm:$0xff]
    %v118 = vld [vmem:[#allocation7 + $0x18] sm:$0xff]
    %v119 = vld [vmem:[#allocation7 + $0x20] sm:$0xff]
    %v120 = vld [vmem:[#allocation7 + $0x28] sm:$0xff]
    %v121 = vld [vmem:[#allocation7 + $0x30] sm:$0xff]
    %v122 = vld [vmem:[#allocation7 + $0x38] sm:$0xff]
    %v123 = vld [vmem:[#allocation7 + $0x40] sm:$0xff]
    %v124 = vld [vmem:[#allocation7 + $0x48] sm:$0xff]
    %v125 = vld [vmem:[#allocation7 + $0x50] sm:$0xff]
    %v126 = vld [vmem:[#allocation7 + $0x58] sm:$0xff]
    %v127 = vld [vmem:[#allocation7 + $0x60] sm:$0xff]
    %v128 = vld [vmem:[#allocation7 + $0x68] sm:$0xff]
    %v129 = vld [vmem:[#allocation7 + $0x70] sm:$0xff]
    %v130 = vld [vmem:[#allocation7 + $0x78] sm:$0xff]
    %v131 = vld [vmem:[#allocation7 + $0x80] sm:$0xff]
    %v132 = vld [vmem:[#allocation7 + $0x88] sm:$0xff]
    %v133 = vld [vmem:[#allocation7 + $0x90] sm:$0xff]
    %v134 = vld [vmem:[#allocation7 + $0x98] sm:$0xff]
    %v135 = vld [vmem:[#allocation7 + $0xa0] sm:$0xff]
    %v136 = vld [vmem:[#allocation7 + $0xa8] sm:$0xff]
    %v137 = vld [vmem:[#allocation7 + $0xb0] sm:$0xff]
    %v138 = vld [vmem:[#allocation7 + $0xb8] sm:$0xff]
    %v139 = vld [vmem:[#allocation7 + $0xc0] sm:$0xff]
    %v140 = vld [vmem:[#allocation7 + $0xc8] sm:$0xff]
    %v141 = vld [vmem:[#allocation7 + $0xd0] sm:$0xff]
    %v142 = vld [vmem:[#allocation7 + $0xd8] sm:$0xff]
    %v143 = vld [vmem:[#allocation7 + $0xe0] sm:$0xff]
    %v144 = vld [vmem:[#allocation7 + $0xe8] sm:$0xff]
    %v145 = vld [vmem:[#allocation7 + $0xf0] sm:$0xff]
    %v146 = vld [vmem:[#allocation7 + $0xf8] sm:$0xff]
    %v147 = vld [vmem:[#allocation7 + $0x100] sm:$0xff]
    %v148 = vld [vmem:[#allocation7 + $0x108] sm:$0xff]
    %v149 = vld [vmem:[#allocation7 + $0x110] sm:$0xff]
    %v150 = vld [vmem:[#allocation7 + $0x118] sm:$0xff]
    %v151 = vld [vmem:[#allocation7 + $0x120] sm:$0xff]
    %v152 = vld [vmem:[#allocation7 + $0x128] sm:$0xff]
    %v153 = vld [vmem:[#allocation7 + $0x130] sm:$0xff]
    %v154 = vld [vmem:[#allocation7 + $0x138] sm:$0xff]
    %v155 = vld [vmem:[#allocation7 + $0x140] sm:$0xff]
    %v156 = vld [vmem:[#allocation7 + $0x148] sm:$0xff]
    %v157 = vld [vmem:[#allocation7 + $0x150] sm:$0xff]
    %v158 = vld [vmem:[#allocation7 + $0x158] sm:$0xff]
    %v159 = vld [vmem:[#allocation7 + $0x160] sm:$0xff]
    %v160 = vld [vmem:[#allocation7 + $0x168] sm:$0xff]
    %v161 = vld [vmem:[#allocation7 + $0x170] sm:$0xff]
    %v162 = vld [vmem:[#allocation7 + $0x178] sm:$0xff]
    %v163 = vld [vmem:[#allocation7 + $0x180] sm:$0xff]
    %v164 = vld [vmem:[#allocation7 + $0x188] sm:$0xff]
    %v165 = vld [vmem:[#allocation7 + $0x190] sm:$0xff]
    %v166 = vld [vmem:[#allocation7 + $0x198] sm:$0xff]
    %v167 = vld [vmem:[#allocation7 + $0x1a0] sm:$0xff]
    %v168 = vld [vmem:[#allocation7 + $0x1a8] sm:$0xff]
    %v169 = vld [vmem:[#allocation7 + $0x1b0] sm:$0xff]
    %v170 = vld [vmem:[#allocation7 + $0x1b8] sm:$0xff]
    %v171 = vld [vmem:[#allocation7 + $0x1c0] sm:$0xff]
    %v172 = vld [vmem:[#allocation7 + $0x1c8] sm:$0xff]
    %v173 = vld [vmem:[#allocation7 + $0x1d0] sm:$0xff]
    %v174 = vld [vmem:[#allocation7 + $0x1d8] sm:$0xff]
    %v175 = vld [vmem:[#allocation7 + $0x1e0] sm:$0xff]
    %v176 = vld [vmem:[#allocation7 + $0x1e8] sm:$0xff]
    %v177 = vld [vmem:[#allocation7 + $0x1f0] sm:$0xff]
    %v178 = vld [vmem:[#allocation7 + $0x1f8] sm:$0xff]
    %v179 = vld [vmem:[#allocation2] sm:$0xf]
    %v180 = vld [vmem:[#allocation2 + $0x4] sm:$0xf]
    %v181 = vld [vmem:[#allocation2 + $0x8] sm:$0xf]
    %v182 = vld [vmem:[#allocation2 + $0xc] sm:$0xf]
    %v183 = vld [vmem:[#allocation2 + $0x10] sm:$0xf]
    %v184 = vld [vmem:[#allocation2 + $0x14] sm:$0xf]
    %v185 = vld [vmem:[#allocation2 + $0x18] sm:$0xf]
    %v186 = vld [vmem:[#allocation2 + $0x1c] sm:$0xf]
    %v187 = vld [vmem:[#allocation2 + $0x20] sm:$0xf]
    %v188 = vld [vmem:[#allocation2 + $0x24] sm:$0xf]
    %v189 = vld [vmem:[#allocation2 + $0x28] sm:$0xf]
    %v190 = vld [vmem:[#allocation2 + $0x2c] sm:$0xf]
    %v191 = vld [vmem:[#allocation2 + $0x30] sm:$0xf]
    %v192 = vld [vmem:[#allocation2 + $0x34] sm:$0xf]
    %v193 = vld [vmem:[#allocation2 + $0x38] sm:$0xf]
    %v194 = vld [vmem:[#allocation2 + $0x3c] sm:$0xf]
    %v195 = vld [vmem:[#allocation2 + $0x40] sm:$0xf]
    %v196 = vld [vmem:[#allocation2 + $0x44] sm:$0xf]
    %v197 = vld [vmem:[#allocation2 + $0x48] sm:$0xf]
    %v198 = vld [vmem:[#allocation2 + $0x4c] sm:$0xf]
    %v199 = vld [vmem:[#allocation2 + $0x50] sm:$0xf]
    %v200 = vld [vmem:[#allocation2 + $0x54] sm:$0xf]
    %v201 = vld [vmem:[#allocation2 + $0x58] sm:$0xf]
    %v202 = vld [vmem:[#allocation2 + $0x5c] sm:$0xf]
    %v203 = vld [vmem:[#allocation2 + $0x60] sm:$0xf]
    %v204 = vld [vmem:[#allocation2 + $0x64] sm:$0xf]
    %v205 = vld [vmem:[#allocation2 + $0x68] sm:$0xf]
    %v206 = vld [vmem:[#allocation2 + $0x6c] sm:$0xf]
    %v207 = vld [vmem:[#allocation2 + $0x70] sm:$0xf]
    %v208 = vld [vmem:[#allocation2 + $0x74] sm:$0xf]
    %v209 = vld [vmem:[#allocation2 + $0x78] sm:$0xf]
    %v210 = vld [vmem:[#allocation2 + $0x7c] sm:$0xf]
    %v211 = vld [vmem:[#allocation2 + $0x80] sm:$0xf]
    %v212 = vld [vmem:[#allocation2 + $0x84] sm:$0xf]
    %v213 = vld [vmem:[#allocation2 + $0x88] sm:$0xf]
    %v214 = vld [vmem:[#allocation2 + $0x8c] sm:$0xf]
    %v215 = vld [vmem:[#allocation2 + $0x90] sm:$0xf]
    %v216 = vld [vmem:[#allocation2 + $0x94] sm:$0xf]
    %v217 = vld [vmem:[#allocation2 + $0x98] sm:$0xf]
    %v218 = vld [vmem:[#allocation2 + $0x9c] sm:$0xf]
    %v219 = vld [vmem:[#allocation2 + $0xa0] sm:$0xf]
    %v220 = vld [vmem:[#allocation2 + $0xa4] sm:$0xf]
    %v221 = vld [vmem:[#allocation2 + $0xa8] sm:$0xf]
    %v222 = vld [vmem:[#allocation2 + $0xac] sm:$0xf]
    %v223 = vld [vmem:[#allocation2 + $0xb0] sm:$0xf]
    %v224 = vld [vmem:[#allocation2 + $0xb4] sm:$0xf]
    %v225 = vld [vmem:[#allocation2 + $0xb8] sm:$0xf]
    %v226 = vld [vmem:[#allocation2 + $0xbc] sm:$0xf]
    %v227 = vld [vmem:[#allocation2 + $0xc0] sm:$0xf]
    %v228 = vld [vmem:[#allocation2 + $0xc4] sm:$0xf]
    %v229 = vld [vmem:[#allocation2 + $0xc8] sm:$0xf]
    %v230 = vld [vmem:[#allocation2 + $0xcc] sm:$0xf]
    %v231 = vld [vmem:[#allocation2 + $0xd0] sm:$0xf]
    %v232 = vld [vmem:[#allocation2 + $0xd4] sm:$0xf]
    %v233 = vld [vmem:[#allocation2 + $0xd8] sm:$0xf]
    %v234 = vld [vmem:[#allocation2 + $0xdc] sm:$0xf]
    %v235 = vld [vmem:[#allocation2 + $0xe0] sm:$0xf]
    %v236 = vld [vmem:[#allocation2 + $0xe4] sm:$0xf]
    %v237 = vld [vmem:[#allocation2 + $0xe8] sm:$0xf]
    %v238 = vld [vmem:[#allocation2 + $0xec] sm:$0xf]
    %v239 = vld [vmem:[#allocation2 + $0xf0] sm:$0xf]
    %v240 = vld [vmem:[#allocation2 + $0xf4] sm:$0xf]
    %v241 = vld [vmem:[#allocation2 + $0xf8] sm:$0xf]
    %v242 = vld [vmem:[#allocation2 + $0xfc] sm:$0xf]
    %v243 = vld [vmem:[#allocation5] sm:$0xf]
    %v244 = vld [vmem:[#allocation5 + $0x4] sm:$0xf]
    %v245 = vld [vmem:[#allocation5 + $0x8] sm:$0xf]
    %v246 = vld [vmem:[#allocation5 + $0xc] sm:$0xf]
    %v247 = vld [vmem:[#allocation5 + $0x10] sm:$0xf]
    %v248 = vld [vmem:[#allocation5 + $0x14] sm:$0xf]
    %v249 = vld [vmem:[#allocation5 + $0x18] sm:$0xf]
    %v250 = vld [vmem:[#allocation5 + $0x1c] sm:$0xf]
    %v251 = vld [vmem:[#allocation5 + $0x20] sm:$0xf]
    %v252 = vld [vmem:[#allocation5 + $0x24] sm:$0xf]
    %v253 = vld [vmem:[#allocation5 + $0x28] sm:$0xf]
    %v254 = vld [vmem:[#allocation5 + $0x2c] sm:$0xf]
    %v255 = vld [vmem:[#allocation5 + $0x30] sm:$0xf]
    %v256 = vld [vmem:[#allocation5 + $0x34] sm:$0xf]
    %v257 = vld [vmem:[#allocation5 + $0x38] sm:$0xf]
    %v258 = vld [vmem:[#allocation5 + $0x3c] sm:$0xf]
    %v323 = vunpack.c.l.b16 %v179
    %v324 = vunpack.c.l.b16 %v180
    %v325 = vunpack.c.l.b16 %v181
    %v326 = vunpack.c.l.b16 %v182
    %v327 = vunpack.c.l.b16 %v183
    %v328 = vunpack.c.l.b16 %v184
    %v329 = vunpack.c.l.b16 %v185
    %v330 = vunpack.c.l.b16 %v186
    %v331 = vunpack.c.l.b16 %v187
    %v332 = vunpack.c.l.b16 %v188
    %v333 = vunpack.c.l.b16 %v189
    %v334 = vunpack.c.l.b16 %v190
    %v335 = vunpack.c.l.b16 %v191
    %v336 = vunpack.c.l.b16 %v192
    %v337 = vunpack.c.l.b16 %v193
    %v338 = vunpack.c.l.b16 %v194
    %v339 = vunpack.c.l.b16 %v195
    %v340 = vunpack.c.l.b16 %v196
    %v341 = vunpack.c.l.b16 %v197
    %v342 = vunpack.c.l.b16 %v198
    %v343 = vunpack.c.l.b16 %v199
    %v344 = vunpack.c.l.b16 %v200
    %v345 = vunpack.c.l.b16 %v201
    %v346 = vunpack.c.l.b16 %v202
    %v347 = vunpack.c.l.b16 %v203
    %v348 = vunpack.c.l.b16 %v204
    %v349 = vunpack.c.l.b16 %v205
    %v350 = vunpack.c.l.b16 %v206
    %v351 = vunpack.c.l.b16 %v207
    %v352 = vunpack.c.l.b16 %v208
    %v353 = vunpack.c.l.b16 %v209
    %v354 = vunpack.c.l.b16 %v210
    %v355 = vunpack.c.l.b16 %v211
    %v356 = vunpack.c.l.b16 %v212
    %v357 = vunpack.c.l.b16 %v213
    %v358 = vunpack.c.l.b16 %v214
    %v359 = vunpack.c.l.b16 %v215
    %v360 = vunpack.c.l.b16 %v216
    %v361 = vunpack.c.l.b16 %v217
    %v362 = vunpack.c.l.b16 %v218
    %v363 = vunpack.c.l.b16 %v219
    %v364 = vunpack.c.l.b16 %v220
    %v365 = vunpack.c.l.b16 %v221
    %v366 = vunpack.c.l.b16 %v222
    %v367 = vunpack.c.l.b16 %v223
    %v368 = vunpack.c.l.b16 %v224
    %v369 = vunpack.c.l.b16 %v225
    %v370 = vunpack.c.l.b16 %v226
    %v371 = vunpack.c.l.b16 %v227
    %v372 = vunpack.c.l.b16 %v228
    %v373 = vunpack.c.l.b16 %v229
    %v374 = vunpack.c.l.b16 %v230
    %v375 = vunpack.c.l.b16 %v231
    %v376 = vunpack.c.l.b16 %v232
    %v377 = vunpack.c.l.b16 %v233
    %v378 = vunpack.c.l.b16 %v234
    %v379 = vunpack.c.l.b16 %v235
    %v380 = vunpack.c.l.b16 %v236
    %v381 = vunpack.c.l.b16 %v237
    %v382 = vunpack.c.l.b16 %v238
    %v383 = vunpack.c.l.b16 %v239
    %v384 = vunpack.c.l.b16 %v240
    %v385 = vunpack.c.l.b16 %v241
    %v386 = vunpack.c.l.b16 %v242
    %v387 = vpack.c.b16 %v324, %v323
    %v388 = vpack.c.b16 %v326, %v325
    %v389 = vpack.c.b16 %v328, %v327
    %v390 = vpack.c.b16 %v330, %v329
    %v391 = vpack.c.b16 %v332, %v331
    %v392 = vpack.c.b16 %v334, %v333
    %v393 = vpack.c.b16 %v336, %v335
    %v394 = vpack.c.b16 %v338, %v337
    %v395 = vpack.c.b16 %v340, %v339
    %v396 = vpack.c.b16 %v342, %v341
    %v397 = vpack.c.b16 %v344, %v343
    %v398 = vpack.c.b16 %v346, %v345
    %v399 = vpack.c.b16 %v348, %v347
    %v400 = vpack.c.b16 %v350, %v349
    %v401 = vpack.c.b16 %v352, %v351
    %v402 = vpack.c.b16 %v354, %v353
    %v403 = vpack.c.b16 %v356, %v355
    %v404 = vpack.c.b16 %v358, %v357
    %v405 = vpack.c.b16 %v360, %v359
    %v406 = vpack.c.b16 %v362, %v361
    %v407 = vpack.c.b16 %v364, %v363
    %v408 = vpack.c.b16 %v366, %v365
    %v409 = vpack.c.b16 %v368, %v367
    %v410 = vpack.c.b16 %v370, %v369
    %v411 = vpack.c.b16 %v372, %v371
    %v412 = vpack.c.b16 %v374, %v373
    %v413 = vpack.c.b16 %v376, %v375
    %v414 = vpack.c.b16 %v378, %v377
    %v415 = vpack.c.b16 %v380, %v379
    %v416 = vpack.c.b16 %v382, %v381
    %v417 = vpack.c.b16 %v384, %v383
    %v418 = vpack.c.b16 %v386, %v385
    %v467 = vunpack.c.l.b16 %v243
    %v468 = vunpack.c.l.b16 %v244
    %v469 = vunpack.c.l.b16 %v245
    %v470 = vunpack.c.l.b16 %v246
    %v471 = vunpack.c.l.b16 %v247
    %v472 = vunpack.c.l.b16 %v248
    %v473 = vunpack.c.l.b16 %v249
    %v474 = vunpack.c.l.b16 %v250
    %v475 = vunpack.c.l.b16 %v251
    %v476 = vunpack.c.l.b16 %v252
    %v477 = vunpack.c.l.b16 %v253
    %v478 = vunpack.c.l.b16 %v254
    %v479 = vunpack.c.l.b16 %v255
    %v480 = vunpack.c.l.b16 %v256
    %v481 = vunpack.c.l.b16 %v257
    %v482 = vunpack.c.l.b16 %v258
    %v483 = vpack.c.b16 %v468, %v467
    %v484 = vpack.c.b16 %v470, %v469
    %v485 = vpack.c.b16 %v472, %v471
    %v486 = vpack.c.b16 %v474, %v473
    %v487 = vpack.c.b16 %v476, %v475
    %v488 = vpack.c.b16 %v478, %v477
    %v489 = vpack.c.b16 %v480, %v479
    %v490 = vpack.c.b16 %v482, %v481
    %499 = vmatpush.bf16.msra.mxu0 %v490
    %500 = vmatpush.bf16.msra.mxu0 %v489
    %501 = vmatpush.bf16.msra.mxu0 %v488
    %502 = vmatpush.bf16.msra.mxu0 %v487
    %503 = vmatpush.bf16.msra.mxu0 %v486
    %504 = vmatpush.bf16.msra.mxu0 %v485
    %505 = vmatpush.bf16.msra.mxu0 %v484
    %506 = vmatpush.bf16.msra.mxu0 %v483
    %507 = vmatmul.bf16.gmra.mxu0 %v387
    %v508 = vpop.f32.mrf.mxu0
    %v509 = vadd.f32 0.0, %v508
    %v510 = vpop.f32.mrf.mxu0
    %v511 = vadd.f32 0.0, %v510
    %512 = vmatmul.bf16.gmra.mxu0 %v388
    %v513 = vpop.f32.mrf.mxu0
    %v514 = vadd.f32 0.0, %v513
    %v515 = vpop.f32.mrf.mxu0
    %v516 = vadd.f32 0.0, %v515
    %517 = vmatmul.bf16.gmra.mxu0 %v389
    %v518 = vpop.f32.mrf.mxu0
    %v519 = vadd.f32 0.0, %v518
    %v520 = vpop.f32.mrf.mxu0
    %v521 = vadd.f32 0.0, %v520
    %522 = vmatmul.bf16.gmra.mxu0 %v390
    %v523 = vpop.f32.mrf.mxu0
    %v524 = vadd.f32 0.0, %v523
    %v525 = vpop.f32.mrf.mxu0
    %v526 = vadd.f32 0.0, %v525
    %527 = vmatmul.bf16.gmra.mxu0 %v391
    %v528 = vpop.f32.mrf.mxu0
    %v529 = vadd.f32 0.0, %v528
    %v530 = vpop.f32.mrf.mxu0
    %v531 = vadd.f32 0.0, %v530
    %532 = vmatmul.bf16.gmra.mxu0 %v392
    %v533 = vpop.f32.mrf.mxu0
    %v534 = vadd.f32 0.0, %v533
    %v535 = vpop.f32.mrf.mxu0
    %v536 = vadd.f32 0.0, %v535
    %537 = vmatmul.bf16.gmra.mxu0 %v393
    %v538 = vpop.f32.mrf.mxu0
    %v539 = vadd.f32 0.0, %v538
    %v540 = vpop.f32.mrf.mxu0
    %v541 = vadd.f32 0.0, %v540
    %542 = vmatmul.bf16.gmra.mxu0 %v394
    %v543 = vpop.f32.mrf.mxu0
    %v544 = vadd.f32 0.0, %v543
    %v545 = vpop.f32.mrf.mxu0
    %v546 = vadd.f32 0.0, %v545
    %547 = vmatmul.bf16.gmra.mxu0 %v395
    %v548 = vpop.f32.mrf.mxu0
    %v549 = vadd.f32 0.0, %v548
    %v550 = vpop.f32.mrf.mxu0
    %v551 = vadd.f32 0.0, %v550
    %552 = vmatmul.bf16.gmra.mxu0 %v396
    %v553 = vpop.f32.mrf.mxu0
    %v554 = vadd.f32 0.0, %v553
    %v555 = vpop.f32.mrf.mxu0
    %v556 = vadd.f32 0.0, %v555
    %557 = vmatmul.bf16.gmra.mxu0 %v397
    %v558 = vpop.f32.mrf.mxu0
    %v559 = vadd.f32 0.0, %v558
    %v560 = vpop.f32.mrf.mxu0
    %v561 = vadd.f32 0.0, %v560
    %562 = vmatmul.bf16.gmra.mxu0 %v398
    %v563 = vpop.f32.mrf.mxu0
    %v564 = vadd.f32 0.0, %v563
    %v565 = vpop.f32.mrf.mxu0
    %v566 = vadd.f32 0.0, %v565
    %567 = vmatmul.bf16.gmra.mxu0 %v399
    %v568 = vpop.f32.mrf.mxu0
    %v569 = vadd.f32 0.0, %v568
    %v570 = vpop.f32.mrf.mxu0
    %v571 = vadd.f32 0.0, %v570
    %572 = vmatmul.bf16.gmra.mxu0 %v400
    %v573 = vpop.f32.mrf.mxu0
    %v574 = vadd.f32 0.0, %v573
    %v575 = vpop.f32.mrf.mxu0
    %v576 = vadd.f32 0.0, %v575
    %577 = vmatmul.bf16.gmra.mxu0 %v401
    %v578 = vpop.f32.mrf.mxu0
    %v579 = vadd.f32 0.0, %v578
    %v580 = vpop.f32.mrf.mxu0
    %v581 = vadd.f32 0.0, %v580
    %582 = vmatmul.bf16.gmra.mxu0 %v402
    %v583 = vpop.f32.mrf.mxu0
    %v584 = vadd.f32 0.0, %v583
    %v585 = vpop.f32.mrf.mxu0
    %v586 = vadd.f32 0.0, %v585
    %587 = vmatmul.bf16.gmra.mxu0 %v403
    %v588 = vpop.f32.mrf.mxu0
    %v589 = vadd.f32 0.0, %v588
    %v590 = vpop.f32.mrf.mxu0
    %v591 = vadd.f32 0.0, %v590
    %592 = vmatmul.bf16.gmra.mxu0 %v404
    %v593 = vpop.f32.mrf.mxu0
    %v594 = vadd.f32 0.0, %v593
    %v595 = vpop.f32.mrf.mxu0
    %v596 = vadd.f32 0.0, %v595
    %597 = vmatmul.bf16.gmra.mxu0 %v405
    %v598 = vpop.f32.mrf.mxu0
    %v599 = vadd.f32 0.0, %v598
    %v600 = vpop.f32.mrf.mxu0
    %v601 = vadd.f32 0.0, %v600
    %602 = vmatmul.bf16.gmra.mxu0 %v406
    %v603 = vpop.f32.mrf.mxu0
    %v604 = vadd.f32 0.0, %v603
    %v605 = vpop.f32.mrf.mxu0
    %v606 = vadd.f32 0.0, %v605
    %607 = vmatmul.bf16.gmra.mxu0 %v407
    %v608 = vpop.f32.mrf.mxu0
    %v609 = vadd.f32 0.0, %v608
    %v610 = vpop.f32.mrf.mxu0
    %v611 = vadd.f32 0.0, %v610
    %612 = vmatmul.bf16.gmra.mxu0 %v408
    %v613 = vpop.f32.mrf.mxu0
    %v614 = vadd.f32 0.0, %v613
    %v615 = vpop.f32.mrf.mxu0
    %v616 = vadd.f32 0.0, %v615
    %617 = vmatmul.bf16.gmra.mxu0 %v409
    %v618 = vpop.f32.mrf.mxu0
    %v619 = vadd.f32 0.0, %v618
    %v620 = vpop.f32.mrf.mxu0
    %v621 = vadd.f32 0.0, %v620
    %622 = vmatmul.bf16.gmra.mxu0 %v410
    %v623 = vpop.f32.mrf.mxu0
    %v624 = vadd.f32 0.0, %v623
    %v625 = vpop.f32.mrf.mxu0
    %v626 = vadd.f32 0.0, %v625
    %627 = vmatmul.bf16.gmra.mxu0 %v411
    %v628 = vpop.f32.mrf.mxu0
    %v629 = vadd.f32 0.0, %v628
    %v630 = vpop.f32.mrf.mxu0
    %v631 = vadd.f32 0.0, %v630
    %632 = vmatmul.bf16.gmra.mxu0 %v412
    %v633 = vpop.f32.mrf.mxu0
    %v634 = vadd.f32 0.0, %v633
    %v635 = vpop.f32.mrf.mxu0
    %v636 = vadd.f32 0.0, %v635
    %637 = vmatmul.bf16.gmra.mxu0 %v413
    %v638 = vpop.f32.mrf.mxu0
    %v639 = vadd.f32 0.0, %v638
    %v640 = vpop.f32.mrf.mxu0
    %v641 = vadd.f32 0.0, %v640
    %642 = vmatmul.bf16.gmra.mxu0 %v414
    %v643 = vpop.f32.mrf.mxu0
    %v644 = vadd.f32 0.0, %v643
    %v645 = vpop.f32.mrf.mxu0
    %v646 = vadd.f32 0.0, %v645
    %647 = vmatmul.bf16.gmra.mxu0 %v415
    %v648 = vpop.f32.mrf.mxu0
    %v649 = vadd.f32 0.0, %v648
    %v650 = vpop.f32.mrf.mxu0
    %v651 = vadd.f32 0.0, %v650
    %652 = vmatmul.bf16.gmra.mxu0 %v416
    %v653 = vpop.f32.mrf.mxu0
    %v654 = vadd.f32 0.0, %v653
    %v655 = vpop.f32.mrf.mxu0
    %v656 = vadd.f32 0.0, %v655
    %657 = vmatmul.bf16.gmra.mxu0 %v417
    %v658 = vpop.f32.mrf.mxu0
    %v659 = vadd.f32 0.0, %v658
    %v660 = vpop.f32.mrf.mxu0
    %v661 = vadd.f32 0.0, %v660
    %662 = vmatmul.bf16.gmra.mxu0 %v418
    %v663 = vpop.f32.mrf.mxu0
    %v664 = vadd.f32 0.0, %v663
    %v665 = vpop.f32.mrf.mxu0
    %v666 = vadd.f32 0.0, %v665
    %667 = vdwg.mxu0
    %v668 = vadd.f32 %v115, %v509
    %v669 = vadd.f32 %v116, %v511
    %v670 = vadd.f32 %v117, %v514
    %v671 = vadd.f32 %v118, %v516
    %v672 = vadd.f32 %v119, %v519
    %v673 = vadd.f32 %v120, %v521
    %v674 = vadd.f32 %v121, %v524
    %v675 = vadd.f32 %v122, %v526
    %v676 = vadd.f32 %v123, %v529
    %v677 = vadd.f32 %v124, %v531
    %v678 = vadd.f32 %v125, %v534
    %v679 = vadd.f32 %v126, %v536
    %v680 = vadd.f32 %v127, %v539
    %v681 = vadd.f32 %v128, %v541
    %v682 = vadd.f32 %v129, %v544
    %v683 = vadd.f32 %v130, %v546
    %v684 = vadd.f32 %v131, %v549
    %v685 = vadd.f32 %v132, %v551
    %v686 = vadd.f32 %v133, %v554
    %v687 = vadd.f32 %v134, %v556
    %v688 = vadd.f32 %v135, %v559
    %v689 = vadd.f32 %v136, %v561
    %v690 = vadd.f32 %v137, %v564
    %v691 = vadd.f32 %v138, %v566
    %v692 = vadd.f32 %v139, %v569
    %v693 = vadd.f32 %v140, %v571
    %v694 = vadd.f32 %v141, %v574
    %v695 = vadd.f32 %v142, %v576
    %v696 = vadd.f32 %v143, %v579
    %v697 = vadd.f32 %v144, %v581
    %v698 = vadd.f32 %v145, %v584
    %v699 = vadd.f32 %v146, %v586
    %v700 = vadd.f32 %v147, %v589
    %v701 = vadd.f32 %v148, %v591
    %v702 = vadd.f32 %v149, %v594
    %v703 = vadd.f32 %v150, %v596
    %v704 = vadd.f32 %v151, %v599
    %v705 = vadd.f32 %v152, %v601
    %v706 = vadd.f32 %v153, %v604
    %v707 = vadd.f32 %v154, %v606
    %v708 = vadd.f32 %v155, %v609
    %v709 = vadd.f32 %v156, %v611
    %v710 = vadd.f32 %v157, %v614
    %v711 = vadd.f32 %v158, %v616
    %v712 = vadd.f32 %v159, %v619
    %v713 = vadd.f32 %v160, %v621
    %v714 = vadd.f32 %v161, %v624
    %v715 = vadd.f32 %v162, %v626
    %v716 = vadd.f32 %v163, %v629
    %v717 = vadd.f32 %v164, %v631
    %v718 = vadd.f32 %v165, %v634
    %v719 = vadd.f32 %v166, %v636
    %v720 = vadd.f32 %v167, %v639
    %v721 = vadd.f32 %v168, %v641
    %v722 = vadd.f32 %v169, %v644
    %v723 = vadd.f32 %v170, %v646
    %v724 = vadd.f32 %v171, %v649
    %v725 = vadd.f32 %v172, %v651
    %v726 = vadd.f32 %v173, %v654
    %v727 = vadd.f32 %v174, %v656
    %v728 = vadd.f32 %v175, %v659
    %v729 = vadd.f32 %v176, %v661
    %v730 = vadd.f32 %v177, %v664
    %v731 = vadd.f32 %v178, %v666
    %732 = vst [vmem:[#allocation7] sm:$0xff] %v668
    %733 = vst [vmem:[#allocation7 + $0x8] sm:$0xff] %v669
    %734 = vst [vmem:[#allocation7 + $0x10] sm:$0xff] %v670
    %735 = vst [vmem:[#allocation7 + $0x18] sm:$0xff] %v671
    %736 = vst [vmem:[#allocation7 + $0x20] sm:$0xff] %v672
    %737 = vst [vmem:[#allocation7 + $0x28] sm:$0xff] %v673
    %738 = vst [vmem:[#allocation7 + $0x30] sm:$0xff] %v674
    %739 = vst [vmem:[#allocation7 + $0x38] sm:$0xff] %v675
    %740 = vst [vmem:[#allocation7 + $0x40] sm:$0xff] %v676
    %741 = vst [vmem:[#allocation7 + $0x48] sm:$0xff] %v677
    %742 = vst [vmem:[#allocation7 + $0x50] sm:$0xff] %v678
    %743 = vst [vmem:[#allocation7 + $0x58] sm:$0xff] %v679
    %744 = vst [vmem:[#allocation7 + $0x60] sm:$0xff] %v680
    %745 = vst [vmem:[#allocation7 + $0x68] sm:$0xff] %v681
    %746 = vst [vmem:[#allocation7 + $0x70] sm:$0xff] %v682
    %747 = vst [vmem:[#allocation7 + $0x78] sm:$0xff] %v683
    %748 = vst [vmem:[#allocation7 + $0x80] sm:$0xff] %v684
    %749 = vst [vmem:[#allocation7 + $0x88] sm:$0xff] %v685
    %750 = vst [vmem:[#allocation7 + $0x90] sm:$0xff] %v686
    %751 = vst [vmem:[#allocation7 + $0x98] sm:$0xff] %v687
    %752 = vst [vmem:[#allocation7 + $0xa0] sm:$0xff] %v688
    %753 = vst [vmem:[#allocation7 + $0xa8] sm:$0xff] %v689
    %754 = vst [vmem:[#allocation7 + $0xb0] sm:$0xff] %v690
    %755 = vst [vmem:[#allocation7 + $0xb8] sm:$0xff] %v691
    %756 = vst [vmem:[#allocation7 + $0xc0] sm:$0xff] %v692
    %757 = vst [vmem:[#allocation7 + $0xc8] sm:$0xff] %v693
    %758 = vst [vmem:[#allocation7 + $0xd0] sm:$0xff] %v694
    %759 = vst [vmem:[#allocation7 + $0xd8] sm:$0xff] %v695
    %760 = vst [vmem:[#allocation7 + $0xe0] sm:$0xff] %v696
    %761 = vst [vmem:[#allocation7 + $0xe8] sm:$0xff] %v697
    %762 = vst [vmem:[#allocation7 + $0xf0] sm:$0xff] %v698
    %763 = vst [vmem:[#allocation7 + $0xf8] sm:$0xff] %v699
    %764 = vst [vmem:[#allocation7 + $0x100] sm:$0xff] %v700
    %765 = vst [vmem:[#allocation7 + $0x108] sm:$0xff] %v701
    %766 = vst [vmem:[#allocation7 + $0x110] sm:$0xff] %v702
    %767 = vst [vmem:[#allocation7 + $0x118] sm:$0xff] %v703
    %768 = vst [vmem:[#allocation7 + $0x120] sm:$0xff] %v704
    %769 = vst [vmem:[#allocation7 + $0x128] sm:$0xff] %v705
    %770 = vst [vmem:[#allocation7 + $0x130] sm:$0xff] %v706
    %771 = vst [vmem:[#allocation7 + $0x138] sm:$0xff] %v707
    %772 = vst [vmem:[#allocation7 + $0x140] sm:$0xff] %v708
    %773 = vst [vmem:[#allocation7 + $0x148] sm:$0xff] %v709
    %774 = vst [vmem:[#allocation7 + $0x150] sm:$0xff] %v710
    %775 = vst [vmem:[#allocation7 + $0x158] sm:$0xff] %v711
    %776 = vst [vmem:[#allocation7 + $0x160] sm:$0xff] %v712
    %777 = vst [vmem:[#allocation7 + $0x168] sm:$0xff] %v713
    %778 = vst [vmem:[#allocation7 + $0x170] sm:$0xff] %v714
    %779 = vst [vmem:[#allocation7 + $0x178] sm:$0xff] %v715
    %780 = vst [vmem:[#allocation7 + $0x180] sm:$0xff] %v716
    %781 = vst [vmem:[#allocation7 + $0x188] sm:$0xff] %v717
    %782 = vst [vmem:[#allocation7 + $0x190] sm:$0xff] %v718
    %783 = vst [vmem:[#allocation7 + $0x198] sm:$0xff] %v719
    %784 = vst [vmem:[#allocation7 + $0x1a0] sm:$0xff] %v720
    %785 = vst [vmem:[#allocation7 + $0x1a8] sm:$0xff] %v721
    %786 = vst [vmem:[#allocation7 + $0x1b0] sm:$0xff] %v722
    %787 = vst [vmem:[#allocation7 + $0x1b8] sm:$0xff] %v723
    %788 = vst [vmem:[#allocation7 + $0x1c0] sm:$0xff] %v724
    %789 = vst [vmem:[#allocation7 + $0x1c8] sm:$0xff] %v725
    %790 = vst [vmem:[#allocation7 + $0x1d0] sm:$0xff] %v726
    %791 = vst [vmem:[#allocation7 + $0x1d8] sm:$0xff] %v727
    %792 = vst [vmem:[#allocation7 + $0x1e0] sm:$0xff] %v728
    %793 = vst [vmem:[#allocation7 + $0x1e8] sm:$0xff] %v729
    %794 = vst [vmem:[#allocation7 + $0x1f0] sm:$0xff] %v730
    %795 = vst [vmem:[#allocation7 + $0x1f8] sm:$0xff] %v731
    // Predicated region
    $region26: #{tpu_custom_call.1} parent=1 // pred_check
      %p796 = pneg %p47
    $region27: #{tpu_custom_call.1} parent=1 // pred_check_branch
      %798 = sbr.rel (%p796) target = $region29
    $region28: #{tpu_custom_call.1} parent=1 // pred_region
      %v799 = vld [vmem:[#allocation7] sm:$0xff]
      %v800 = vld [vmem:[#allocation7 + $0x8] sm:$0xff]
      %v801 = vld [vmem:[#allocation7 + $0x10] sm:$0xff]
      %v802 = vld [vmem:[#allocation7 + $0x18] sm:$0xff]
      %v803 = vld [vmem:[#allocation7 + $0x20] sm:$0xff]
      %v804 = vld [vmem:[#allocation7 + $0x28] sm:$0xff]
      %v805 = vld [vmem:[#allocation7 + $0x30] sm:$0xff]
      %v806 = vld [vmem:[#allocation7 + $0x38] sm:$0xff]
      %v807 = vld [vmem:[#allocation7 + $0x40] sm:$0xff]
      %v808 = vld [vmem:[#allocation7 + $0x48] sm:$0xff]
      %v809 = vld [vmem:[#allocation7 + $0x50] sm:$0xff]
      %v810 = vld [vmem:[#allocation7 + $0x58] sm:$0xff]
      %v811 = vld [vmem:[#allocation7 + $0x60] sm:$0xff]
      %v812 = vld [vmem:[#allocation7 + $0x68] sm:$0xff]
      %v813 = vld [vmem:[#allocation7 + $0x70] sm:$0xff]
      %v814 = vld [vmem:[#allocation7 + $0x78] sm:$0xff]
      %v815 = vld [vmem:[#allocation7 + $0x80] sm:$0xff]
      %v816 = vld [vmem:[#allocation7 + $0x88] sm:$0xff]
      %v817 = vld [vmem:[#allocation7 + $0x90] sm:$0xff]
      %v818 = vld [vmem:[#allocation7 + $0x98] sm:$0xff]
      %v819 = vld [vmem:[#allocation7 + $0xa0] sm:$0xff]
      %v820 = vld [vmem:[#allocation7 + $0xa8] sm:$0xff]
      %v821 = vld [vmem:[#allocation7 + $0xb0] sm:$0xff]
      %v822 = vld [vmem:[#allocation7 + $0xb8] sm:$0xff]
      %v823 = vld [vmem:[#allocation7 + $0xc0] sm:$0xff]
      %v824 = vld [vmem:[#allocation7 + $0xc8] sm:$0xff]
      %v825 = vld [vmem:[#allocation7 + $0xd0] sm:$0xff]
      %v826 = vld [vmem:[#allocation7 + $0xd8] sm:$0xff]
      %v827 = vld [vmem:[#allocation7 + $0xe0] sm:$0xff]
      %v828 = vld [vmem:[#allocation7 + $0xe8] sm:$0xff]
      %v829 = vld [vmem:[#allocation7 + $0xf0] sm:$0xff]
      %v830 = vld [vmem:[#allocation7 + $0xf8] sm:$0xff]
      %v831 = vld [vmem:[#allocation7 + $0x100] sm:$0xff]
      %v832 = vld [vmem:[#allocation7 + $0x108] sm:$0xff]
      %v833 = vld [vmem:[#allocation7 + $0x110] sm:$0xff]
      %v834 = vld [vmem:[#allocation7 + $0x118] sm:$0xff]
      %v835 = vld [vmem:[#allocation7 + $0x120] sm:$0xff]
      %v836 = vld [vmem:[#allocation7 + $0x128] sm:$0xff]
      %v837 = vld [vmem:[#allocation7 + $0x130] sm:$0xff]
      %v838 = vld [vmem:[#allocation7 + $0x138] sm:$0xff]
      %v839 = vld [vmem:[#allocation7 + $0x140] sm:$0xff]
      %v840 = vld [vmem:[#allocation7 + $0x148] sm:$0xff]
      %v841 = vld [vmem:[#allocation7 + $0x150] sm:$0xff]
      %v842 = vld [vmem:[#allocation7 + $0x158] sm:$0xff]
      %v843 = vld [vmem:[#allocation7 + $0x160] sm:$0xff]
      %v844 = vld [vmem:[#allocation7 + $0x168] sm:$0xff]
      %v845 = vld [vmem:[#allocation7 + $0x170] sm:$0xff]
      %v846 = vld [vmem:[#allocation7 + $0x178] sm:$0xff]
      %v847 = vld [vmem:[#allocation7 + $0x180] sm:$0xff]
      %v848 = vld [vmem:[#allocation7 + $0x188] sm:$0xff]
      %v849 = vld [vmem:[#allocation7 + $0x190] sm:$0xff]
      %v850 = vld [vmem:[#allocation7 + $0x198] sm:$0xff]
      %v851 = vld [vmem:[#allocation7 + $0x1a0] sm:$0xff]
      %v852 = vld [vmem:[#allocation7 + $0x1a8] sm:$0xff]
      %v853 = vld [vmem:[#allocation7 + $0x1b0] sm:$0xff]
      %v854 = vld [vmem:[#allocation7 + $0x1b8] sm:$0xff]
      %v855 = vld [vmem:[#allocation7 + $0x1c0] sm:$0xff]
      %v856 = vld [vmem:[#allocation7 + $0x1c8] sm:$0xff]
      %v857 = vld [vmem:[#allocation7 + $0x1d0] sm:$0xff]
      %v858 = vld [vmem:[#allocation7 + $0x1d8] sm:$0xff]
      %v859 = vld [vmem:[#allocation7 + $0x1e0] sm:$0xff]
      %v860 = vld [vmem:[#allocation7 + $0x1e8] sm:$0xff]
      %v861 = vld [vmem:[#allocation7 + $0x1f0] sm:$0xff]
      %v862 = vld [vmem:[#allocation7 + $0x1f8] sm:$0xff]
      %v863 = vld [vmem:[%s2] sm:$0x1]
      %v865 = vperm.slane %v863, 0
      %v867 = vadd.f32 %v799, %v865
      %v868 = vadd.f32 %v800, %v865
      %v869 = vadd.f32 %v801, %v865
      %v870 = vadd.f32 %v802, %v865
      %v871 = vadd.f32 %v803, %v865
      %v872 = vadd.f32 %v804, %v865
      %v873 = vadd.f32 %v805, %v865
      %v874 = vadd.f32 %v806, %v865
      %v875 = vadd.f32 %v807, %v865
      %v876 = vadd.f32 %v808, %v865
      %v877 = vadd.f32 %v809, %v865
      %v878 = vadd.f32 %v810, %v865
      %v879 = vadd.f32 %v811, %v865
      %v880 = vadd.f32 %v812, %v865
      %v881 = vadd.f32 %v813, %v865
      %v882 = vadd.f32 %v814, %v865
      %v883 = vadd.f32 %v815, %v865
      %v884 = vadd.f32 %v816, %v865
      %v885 = vadd.f32 %v817, %v865
      %v886 = vadd.f32 %v818, %v865
      %v887 = vadd.f32 %v819, %v865
      %v888 = vadd.f32 %v820, %v865
      %v889 = vadd.f32 %v821, %v865
      %v890 = vadd.f32 %v822, %v865
      %v891 = vadd.f32 %v823, %v865
      %v892 = vadd.f32 %v824, %v865
      %v893 = vadd.f32 %v825, %v865
      %v894 = vadd.f32 %v826, %v865
      %v895 = vadd.f32 %v827, %v865
      %v896 = vadd.f32 %v828, %v865
      %v897 = vadd.f32 %v829, %v865
      %v898 = vadd.f32 %v830, %v865
      %v899 = vadd.f32 %v831, %v865
      %v900 = vadd.f32 %v832, %v865
      %v901 = vadd.f32 %v833, %v865
      %v902 = vadd.f32 %v834, %v865
      %v903 = vadd.f32 %v835, %v865
      %v904 = vadd.f32 %v836, %v865
      %v905 = vadd.f32 %v837, %v865
      %v906 = vadd.f32 %v838, %v865
      %v907 = vadd.f32 %v839, %v865
      %v908 = vadd.f32 %v840, %v865
      %v909 = vadd.f32 %v841, %v865
      %v910 = vadd.f32 %v842, %v865
      %v911 = vadd.f32 %v843, %v865
      %v912 = vadd.f32 %v844, %v865
      %v913 = vadd.f32 %v845, %v865
      %v914 = vadd.f32 %v846, %v865
      %v915 = vadd.f32 %v847, %v865
      %v916 = vadd.f32 %v848, %v865
      %v917 = vadd.f32 %v849, %v865
      %v918 = vadd.f32 %v850, %v865
      %v919 = vadd.f32 %v851, %v865
      %v920 = vadd.f32 %v852, %v865
      %v921 = vadd.f32 %v853, %v865
      %v922 = vadd.f32 %v854, %v865
      %v923 = vadd.f32 %v855, %v865
      %v924 = vadd.f32 %v856, %v865
      %v925 = vadd.f32 %v857, %v865
      %v926 = vadd.f32 %v858, %v865
      %v927 = vadd.f32 %v859, %v865
      %v928 = vadd.f32 %v860, %v865
      %v929 = vadd.f32 %v861, %v865
      %v930 = vadd.f32 %v862, %v865
      %vm931 = vcmp.gt.f32.partialorder %v867, 0.0
      %vm932 = vcmp.gt.f32.partialorder %v868, 0.0
      %vm933 = vcmp.gt.f32.partialorder %v869, 0.0
      %vm934 = vcmp.gt.f32.partialorder %v870, 0.0
      %vm935 = vcmp.gt.f32.partialorder %v871, 0.0
      %vm936 = vcmp.gt.f32.partialorder %v872, 0.0
      %vm937 = vcmp.gt.f32.partialorder %v873, 0.0
      %vm938 = vcmp.gt.f32.partialorder %v874, 0.0
      %vm939 = vcmp.gt.f32.partialorder %v875, 0.0
      %vm940 = vcmp.gt.f32.partialorder %v876, 0.0
      %vm941 = vcmp.gt.f32.partialorder %v877, 0.0
      %vm942 = vcmp.gt.f32.partialorder %v878, 0.0
      %vm943 = vcmp.gt.f32.partialorder %v879, 0.0
      %vm944 = vcmp.gt.f32.partialorder %v880, 0.0
      %vm945 = vcmp.gt.f32.partialorder %v881, 0.0
      %vm946 = vcmp.gt.f32.partialorder %v882, 0.0
      %vm947 = vcmp.gt.f32.partialorder %v883, 0.0
      %vm948 = vcmp.gt.f32.partialorder %v884, 0.0
      %vm949 = vcmp.gt.f32.partialorder %v885, 0.0
      %vm950 = vcmp.gt.f32.partialorder %v886, 0.0
      %vm951 = vcmp.gt.f32.partialorder %v887, 0.0
      %vm952 = vcmp.gt.f32.partialorder %v888, 0.0
      %vm953 = vcmp.gt.f32.partialorder %v889, 0.0
      %vm954 = vcmp.gt.f32.partialorder %v890, 0.0
      %vm955 = vcmp.gt.f32.partialorder %v891, 0.0
      %vm956 = vcmp.gt.f32.partialorder %v892, 0.0
      %vm957 = vcmp.gt.f32.partialorder %v893, 0.0
      %vm958 = vcmp.gt.f32.partialorder %v894, 0.0
      %vm959 = vcmp.gt.f32.partialorder %v895, 0.0
      %vm960 = vcmp.gt.f32.partialorder %v896, 0.0
      %vm961 = vcmp.gt.f32.partialorder %v897, 0.0
      %vm962 = vcmp.gt.f32.partialorder %v898, 0.0
      %vm963 = vcmp.gt.f32.partialorder %v899, 0.0
      %vm964 = vcmp.gt.f32.partialorder %v900, 0.0
      %vm965 = vcmp.gt.f32.partialorder %v901, 0.0
      %vm966 = vcmp.gt.f32.partialorder %v902, 0.0
      %vm967 = vcmp.gt.f32.partialorder %v903, 0.0
      %vm968 = vcmp.gt.f32.partialorder %v904, 0.0
      %vm969 = vcmp.gt.f32.partialorder %v905, 0.0
      %vm970 = vcmp.gt.f32.partialorder %v906, 0.0
      %vm971 = vcmp.gt.f32.partialorder %v907, 0.0
      %vm972 = vcmp.gt.f32.partialorder %v908, 0.0
      %vm973 = vcmp.gt.f32.partialorder %v909, 0.0
      %vm974 = vcmp.gt.f32.partialorder %v910, 0.0
      %vm975 = vcmp.gt.f32.partialorder %v911, 0.0
      %vm976 = vcmp.gt.f32.partialorder %v912, 0.0
      %vm977 = vcmp.gt.f32.partialorder %v913, 0.0
      %vm978 = vcmp.gt.f32.partialorder %v914, 0.0
      %vm979 = vcmp.gt.f32.partialorder %v915, 0.0
      %vm980 = vcmp.gt.f32.partialorder %v916, 0.0
      %vm981 = vcmp.gt.f32.partialorder %v917, 0.0
      %vm982 = vcmp.gt.f32.partialorder %v918, 0.0
      %vm983 = vcmp.gt.f32.partialorder %v919, 0.0
      %vm984 = vcmp.gt.f32.partialorder %v920, 0.0
      %vm985 = vcmp.gt.f32.partialorder %v921, 0.0
      %vm986 = vcmp.gt.f32.partialorder %v922, 0.0
      %vm987 = vcmp.gt.f32.partialorder %v923, 0.0
      %vm988 = vcmp.gt.f32.partialorder %v924, 0.0
      %vm989 = vcmp.gt.f32.partialorder %v925, 0.0
      %vm990 = vcmp.gt.f32.partialorder %v926, 0.0
      %vm991 = vcmp.gt.f32.partialorder %v927, 0.0
      %vm992 = vcmp.gt.f32.partialorder %v928, 0.0
      %vm993 = vcmp.gt.f32.partialorder %v929, 0.0
      %vm994 = vcmp.gt.f32.partialorder %v930, 0.0
      %v995 = vmul.f32 %v867, 0.01
      %v996 = vmul.f32 %v868, 0.01
      %v997 = vmul.f32 %v869, 0.01
      %v998 = vmul.f32 %v870, 0.01
      %v999 = vmul.f32 %v871, 0.01
      %v1000 = vmul.f32 %v872, 0.01
      %v1001 = vmul.f32 %v873, 0.01
      %v1002 = vmul.f32 %v874, 0.01
      %v1003 = vmul.f32 %v875, 0.01
      %v1004 = vmul.f32 %v876, 0.01
      %v1005 = vmul.f32 %v877, 0.01
      %v1006 = vmul.f32 %v878, 0.01
      %v1007 = vmul.f32 %v879, 0.01
      %v1008 = vmul.f32 %v880, 0.01
      %v1009 = vmul.f32 %v881, 0.01
      %v1010 = vmul.f32 %v882, 0.01
      %v1011 = vmul.f32 %v883, 0.01
      %v1012 = vmul.f32 %v884, 0.01
      %v1013 = vmul.f32 %v885, 0.01
      %v1014 = vmul.f32 %v886, 0.01
      %v1015 = vmul.f32 %v887, 0.01
      %v1016 = vmul.f32 %v888, 0.01
      %v1017 = vmul.f32 %v889, 0.01
      %v1018 = vmul.f32 %v890, 0.01
      %v1019 = vmul.f32 %v891, 0.01
      %v1020 = vmul.f32 %v892, 0.01
      %v1021 = vmul.f32 %v893, 0.01
      %v1022 = vmul.f32 %v894, 0.01
      %v1023 = vmul.f32 %v895, 0.01
      %v1024 = vmul.f32 %v896, 0.01
      %v1025 = vmul.f32 %v897, 0.01
      %v1026 = vmul.f32 %v898, 0.01
      %v1027 = vmul.f32 %v899, 0.01
      %v1028 = vmul.f32 %v900, 0.01
      %v1029 = vmul.f32 %v901, 0.01
      %v1030 = vmul.f32 %v902, 0.01
      %v1031 = vmul.f32 %v903, 0.01
      %v1032 = vmul.f32 %v904, 0.01
      %v1033 = vmul.f32 %v905, 0.01
      %v1034 = vmul.f32 %v906, 0.01
      %v1035 = vmul.f32 %v907, 0.01
      %v1036 = vmul.f32 %v908, 0.01
      %v1037 = vmul.f32 %v909, 0.01
      %v1038 = vmul.f32 %v910, 0.01
      %v1039 = vmul.f32 %v911, 0.01
      %v1040 = vmul.f32 %v912, 0.01
      %v1041 = vmul.f32 %v913, 0.01
      %v1042 = vmul.f32 %v914, 0.01
      %v1043 = vmul.f32 %v915, 0.01
      %v1044 = vmul.f32 %v916, 0.01
      %v1045 = vmul.f32 %v917, 0.01
      %v1046 = vmul.f32 %v918, 0.01
      %v1047 = vmul.f32 %v919, 0.01
      %v1048 = vmul.f32 %v920, 0.01
      %v1049 = vmul.f32 %v921, 0.01
      %v1050 = vmul.f32 %v922, 0.01
      %v1051 = vmul.f32 %v923, 0.01
      %v1052 = vmul.f32 %v924, 0.01
      %v1053 = vmul.f32 %v925, 0.01
      %v1054 = vmul.f32 %v926, 0.01
      %v1055 = vmul.f32 %v927, 0.01
      %v1056 = vmul.f32 %v928, 0.01
      %v1057 = vmul.f32 %v929, 0.01
      %v1058 = vmul.f32 %v930, 0.01
      %v1059 = vsel %vm931, %v867, %v995
      %v1060 = vsel %vm932, %v868, %v996
      %v1061 = vsel %vm933, %v869, %v997
      %v1062 = vsel %vm934, %v870, %v998
      %v1063 = vsel %vm935, %v871, %v999
      %v1064 = vsel %vm936, %v872, %v1000
      %v1065 = vsel %vm937, %v873, %v1001
      %v1066 = vsel %vm938, %v874, %v1002
      %v1067 = vsel %vm939, %v875, %v1003
      %v1068 = vsel %vm940, %v876, %v1004
      %v1069 = vsel %vm941, %v877, %v1005
      %v1070 = vsel %vm942, %v878, %v1006
      %v1071 = vsel %vm943, %v879, %v1007
      %v1072 = vsel %vm944, %v880, %v1008
      %v1073 = vsel %vm945, %v881, %v1009
      %v1074 = vsel %vm946, %v882, %v1010
      %v1075 = vsel %vm947, %v883, %v1011
      %v1076 = vsel %vm948, %v884, %v1012
      %v1077 = vsel %vm949, %v885, %v1013
      %v1078 = vsel %vm950, %v886, %v1014
      %v1079 = vsel %vm951, %v887, %v1015
      %v1080 = vsel %vm952, %v888, %v1016
      %v1081 = vsel %vm953, %v889, %v1017
      %v1082 = vsel %vm954, %v890, %v1018
      %v1083 = vsel %vm955, %v891, %v1019
      %v1084 = vsel %vm956, %v892, %v1020
      %v1085 = vsel %vm957, %v893, %v1021
      %v1086 = vsel %vm958, %v894, %v1022
      %v1087 = vsel %vm959, %v895, %v1023
      %v1088 = vsel %vm960, %v896, %v1024
      %v1089 = vsel %vm961, %v897, %v1025
      %v1090 = vsel %vm962, %v898, %v1026
      %v1091 = vsel %vm963, %v899, %v1027
      %v1092 = vsel %vm964, %v900, %v1028
      %v1093 = vsel %vm965, %v901, %v1029
      %v1094 = vsel %vm966, %v902, %v1030
      %v1095 = vsel %vm967, %v903, %v1031
      %v1096 = vsel %vm968, %v904, %v1032
      %v1097 = vsel %vm969, %v905, %v1033
      %v1098 = vsel %vm970, %v906, %v1034
      %v1099 = vsel %vm971, %v907, %v1035
      %v1100 = vsel %vm972, %v908, %v1036
      %v1101 = vsel %vm973, %v909, %v1037
      %v1102 = vsel %vm974, %v910, %v1038
      %v1103 = vsel %vm975, %v911, %v1039
      %v1104 = vsel %vm976, %v912, %v1040
      %v1105 = vsel %vm977, %v913, %v1041
      %v1106 = vsel %vm978, %v914, %v1042
      %v1107 = vsel %vm979, %v915, %v1043
      %v1108 = vsel %vm980, %v916, %v1044
      %v1109 = vsel %vm981, %v917, %v1045
      %v1110 = vsel %vm982, %v918, %v1046
      %v1111 = vsel %vm983, %v919, %v1047
      %v1112 = vsel %vm984, %v920, %v1048
      %v1113 = vsel %vm985, %v921, %v1049
      %v1114 = vsel %vm986, %v922, %v1050
      %v1115 = vsel %vm987, %v923, %v1051
      %v1116 = vsel %vm988, %v924, %v1052
      %v1117 = vsel %vm989, %v925, %v1053
      %v1118 = vsel %vm990, %v926, %v1054
      %v1119 = vsel %vm991, %v927, %v1055
      %v1120 = vsel %vm992, %v928, %v1056
      %v1121 = vsel %vm993, %v929, %v1057
      %v1122 = vsel %vm994, %v930, %v1058
      %1123 = vst [vmem:[#allocation7] sm:$0xff] %v1059
      %1124 = vst [vmem:[#allocation7 + $0x8] sm:$0xff] %v1060
      %1125 = vst [vmem:[#allocation7 + $0x10] sm:$0xff] %v1061
      %1126 = vst [vmem:[#allocation7 + $0x18] sm:$0xff] %v1062
      %1127 = vst [vmem:[#allocation7 + $0x20] sm:$0xff] %v1063
      %1128 = vst [vmem:[#allocation7 + $0x28] sm:$0xff] %v1064
      %1129 = vst [vmem:[#allocation7 + $0x30] sm:$0xff] %v1065
      %1130 = vst [vmem:[#allocation7 + $0x38] sm:$0xff] %v1066
      %1131 = vst [vmem:[#allocation7 + $0x40] sm:$0xff] %v1067
      %1132 = vst [vmem:[#allocation7 + $0x48] sm:$0xff] %v1068
      %1133 = vst [vmem:[#allocation7 + $0x50] sm:$0xff] %v1069
      %1134 = vst [vmem:[#allocation7 + $0x58] sm:$0xff] %v1070
      %1135 = vst [vmem:[#allocation7 + $0x60] sm:$0xff] %v1071
      %1136 = vst [vmem:[#allocation7 + $0x68] sm:$0xff] %v1072
      %1137 = vst [vmem:[#allocation7 + $0x70] sm:$0xff] %v1073
      %1138 = vst [vmem:[#allocation7 + $0x78] sm:$0xff] %v1074
      %1139 = vst [vmem:[#allocation7 + $0x80] sm:$0xff] %v1075
      %1140 = vst [vmem:[#allocation7 + $0x88] sm:$0xff] %v1076
      %1141 = vst [vmem:[#allocation7 + $0x90] sm:$0xff] %v1077
      %1142 = vst [vmem:[#allocation7 + $0x98] sm:$0xff] %v1078
      %1143 = vst [vmem:[#allocation7 + $0xa0] sm:$0xff] %v1079
      %1144 = vst [vmem:[#allocation7 + $0xa8] sm:$0xff] %v1080
      %1145 = vst [vmem:[#allocation7 + $0xb0] sm:$0xff] %v1081
      %1146 = vst [vmem:[#allocation7 + $0xb8] sm:$0xff] %v1082
      %1147 = vst [vmem:[#allocation7 + $0xc0] sm:$0xff] %v1083
      %1148 = vst [vmem:[#allocation7 + $0xc8] sm:$0xff] %v1084
      %1149 = vst [vmem:[#allocation7 + $0xd0] sm:$0xff] %v1085
      %1150 = vst [vmem:[#allocation7 + $0xd8] sm:$0xff] %v1086
      %1151 = vst [vmem:[#allocation7 + $0xe0] sm:$0xff] %v1087
      %1152 = vst [vmem:[#allocation7 + $0xe8] sm:$0xff] %v1088
      %1153 = vst [vmem:[#allocation7 + $0xf0] sm:$0xff] %v1089
      %1154 = vst [vmem:[#allocation7 + $0xf8] sm:$0xff] %v1090
      %1155 = vst [vmem:[#allocation7 + $0x100] sm:$0xff] %v1091
      %1156 = vst [vmem:[#allocation7 + $0x108] sm:$0xff] %v1092
      %1157 = vst [vmem:[#allocation7 + $0x110] sm:$0xff] %v1093
      %1158 = vst [vmem:[#allocation7 + $0x118] sm:$0xff] %v1094
      %1159 = vst [vmem:[#allocation7 + $0x120] sm:$0xff] %v1095
      %1160 = vst [vmem:[#allocation7 + $0x128] sm:$0xff] %v1096
      %1161 = vst [vmem:[#allocation7 + $0x130] sm:$0xff] %v1097
      %1162 = vst [vmem:[#allocation7 + $0x138] sm:$0xff] %v1098
      %1163 = vst [vmem:[#allocation7 + $0x140] sm:$0xff] %v1099
      %1164 = vst [vmem:[#allocation7 + $0x148] sm:$0xff] %v1100
      %1165 = vst [vmem:[#allocation7 + $0x150] sm:$0xff] %v1101
      %1166 = vst [vmem:[#allocation7 + $0x158] sm:$0xff] %v1102
      %1167 = vst [vmem:[#allocation7 + $0x160] sm:$0xff] %v1103
      %1168 = vst [vmem:[#allocation7 + $0x168] sm:$0xff] %v1104
      %1169 = vst [vmem:[#allocation7 + $0x170] sm:$0xff] %v1105
      %1170 = vst [vmem:[#allocation7 + $0x178] sm:$0xff] %v1106
      %1171 = vst [vmem:[#allocation7 + $0x180] sm:$0xff] %v1107
      %1172 = vst [vmem:[#allocation7 + $0x188] sm:$0xff] %v1108
      %1173 = vst [vmem:[#allocation7 + $0x190] sm:$0xff] %v1109
      %1174 = vst [vmem:[#allocation7 + $0x198] sm:$0xff] %v1110
      %1175 = vst [vmem:[#allocation7 + $0x1a0] sm:$0xff] %v1111
      %1176 = vst [vmem:[#allocation7 + $0x1a8] sm:$0xff] %v1112
      %1177 = vst [vmem:[#allocation7 + $0x1b0] sm:$0xff] %v1113
      %1178 = vst [vmem:[#allocation7 + $0x1b8] sm:$0xff] %v1114
      %1179 = vst [vmem:[#allocation7 + $0x1c0] sm:$0xff] %v1115
      %1180 = vst [vmem:[#allocation7 + $0x1c8] sm:$0xff] %v1116
      %1181 = vst [vmem:[#allocation7 + $0x1d0] sm:$0xff] %v1117
      %1182 = vst [vmem:[#allocation7 + $0x1d8] sm:$0xff] %v1118
      %1183 = vst [vmem:[#allocation7 + $0x1e0] sm:$0xff] %v1119
      %1184 = vst [vmem:[#allocation7 + $0x1e8] sm:$0xff] %v1120
      %1185 = vst [vmem:[#allocation7 + $0x1f0] sm:$0xff] %v1121
      %1186 = vst [vmem:[#allocation7 + $0x1f8] sm:$0xff] %v1122
    $region29: #{tpu_custom_call.1} parent=1 // pred_fallthru
      _
    // Predicated region
    $region30: #{tpu_custom_call.1} parent=1 // pred_check
      _
    $region31: #{tpu_custom_call.1} parent=1 // pred_check_branch
      %1188 = sbr.rel (0) target = $region33
    $region32: #{tpu_custom_call.1} parent=1 // pred_region
      %1190 = vsyncadd [#allocation4], 0
      %s1191 = sshll.u32 [#allocation7], 4
      %s1192 = int_to_ptr.vmem [resolvable:$true] %s1191
      %s1193 = sshll.u32 %s3, 4
      %s1194 = int_to_ptr.hbm [resolvable:$true] %s1193
      %1199 = dma.vmem_to_hbm [thread:$0]  %s1192, 8192, %s1194, [#allocation4], 128, 128, 8
    $region33: #{tpu_custom_call.1} parent=1 // pred_fallthru
      _
    // Predicated region
    $region34: #{tpu_custom_call.1} parent=1 // pred_check
      _
    $region35: #{tpu_custom_call.1} parent=1 // pred_check_branch
      %1201 = sbr.rel (0) target = $region37
    $region36: #{tpu_custom_call.1} parent=1 // pred_region
      %1203 = dma.done [#allocation4], 8192
    $region37: #{tpu_custom_call.1} parent=1 // pred_fallthru
      _
    %1204 = vsyncpa [#allocation3], 1
    %1205 = vsyncpa [#allocation6], 1
    %1206 = vsyncpa [#allocation4], 1

</llo_original>
